<compile_context>
chip_gen: v6e
topology: v6e:2x2x1
jax: 0.10.0
libtpu: 0.0.40
codegen_flags: <defaults>
</compile_context>

<pallas_src>
import jax
import jax.numpy as jnp
from jax.experimental import pallas as pl
from jax.experimental.pallas import tpu as pltpu


def _normalize_kernel(x_ref, scale_ref, bias_ref, o_ref):
    # x_ref:  (TR, TC) tile of the flattened image.
    # scale_ref / bias_ref: (TR, 1) per-row (i.e. per (n, c)) statistics.
    x = x_ref[...].astype(jnp.float32)
    o_ref[...] = (x * scale_ref[...] + bias_ref[...]).astype(o_ref.dtype)


def _pick_tile(dim: int, quantum: int, max_tile: int) -> int:
    """Largest tile t <= max_tile with t % quantum == 0 and dim % t == 0.

    Falls back to the full extent (always a legal block size) when the dim is
    not a multiple of the layout quantum.
    """
    if dim % quantum != 0:
        return dim
    best = quantum
    t = quantum
    limit = min(dim, max(max_tile, quantum))
    while t <= limit:
        if dim % t == 0:
            best = t
        t += quantum
    return best


def normalize_pallas(x: jax.Array, mean, std, *, target_tile_bytes: int = 1 << 20) -> jax.Array:
    """(x - mean[c]) / std[c] over an NCHW tensor, per-channel."""
    N, C, H, W = x.shape
    mean = jnp.asarray(mean, dtype=jnp.float32).reshape(C)
    std = jnp.asarray(std, dtype=jnp.float32).reshape(C)

    # Fold the stats: (x - mean) / std == x * (1/std) + (-mean/std)
    scale = 1.0 / std
    bias = -mean * scale

    rows = N * C
    cols = H * W
    x2 = x.reshape(rows, cols)  # contiguous -> metadata-only reshape

    # Per-row statistics: row index = n*C + c  ->  channel = row % C.
    scale_rows = jnp.tile(scale, N).reshape(rows, 1)
    bias_rows = jnp.tile(bias, N).reshape(rows, 1)

    itemsize = jnp.dtype(x.dtype).itemsize
    sublane_q = {4: 8, 2: 16, 1: 32}.get(itemsize, 8)

    # Lane-dense column tile (multiple of 128, up to 2048 lanes), then size the
    # row tile so one tile moves ~target_tile_bytes.
    tcol = _pick_tile(cols, 128, 2048)
    max_trow = max(sublane_q, target_tile_bytes // max(1, tcol * itemsize))
    trow = _pick_tile(rows, sublane_q, max_trow)

    grid = (rows // trow, cols // tcol)

    out2 = pl.pallas_call(
        _normalize_kernel,
        out_shape=jax.ShapeDtypeStruct((rows, cols), x.dtype),
        grid=grid,
        in_specs=[
            pl.BlockSpec((trow, tcol), lambda i, j: (i, j)),
            pl.BlockSpec((trow, 1), lambda i, j: (i, 0)),
            pl.BlockSpec((trow, 1), lambda i, j: (i, 0)),
        ],
        out_specs=pl.BlockSpec((trow, tcol), lambda i, j: (i, j)),
        compiler_params=pltpu.CompilerParams(
            dimension_semantics=("parallel", "parallel")),
    )(x2, scale_rows, bias_rows)

    return out2.reshape(N, C, H, W)


class Normalize:
    """JAX/Pallas port of the PyTorch Normalize augmentation module."""

    def __init__(self, mean_input, std_input, mean_target, std_target):
        self.mean_input = jnp.asarray(mean_input, jnp.float32)
        self.std_input = jnp.asarray(std_input, jnp.float32)
        self.mean_target = jnp.asarray(mean_target, jnp.float32)
        self.std_target = jnp.asarray(std_target, jnp.float32)

    def __call__(self, sample):
        conditioning, target = sample
        # Two mem-bound calls; fusing would require an extra concat copy which
        # costs more HBM traffic than the saved launch overhead.
        transformed_conditioning = normalize_pallas(
            conditioning, self.mean_input, self.std_input)
        transformed_target = normalize_pallas(
            target, self.mean_target, self.std_target)
        return (transformed_conditioning, transformed_target)


if __name__ == "__main__":
    key = jax.random.PRNGKey(0)
    k1, k2 = jax.random.split(key)

    N, C, H, W = 2, 4, 16, 16
    conditioning = jax.random.normal(k1, (N, C, H, W), dtype=jnp.float32)
    target = jax.random.normal(k2, (N, C, H, W), dtype=jnp.float32)

    # Deterministic per-channel statistics (synthetic — not loaded from disk).
    mean_input = jnp.array([0.10, 0.20, 0.30, 0.40], jnp.float32)
    std_input = jnp.array([0.50, 0.60, 0.70, 0.80], jnp.float32)
    mean_target = jnp.array([-0.10, 0.00, 0.10, 0.20], jnp.float32)
    std_target = jnp.array([1.00, 1.25, 1.50, 1.75], jnp.float32)

    module = Normalize(mean_input, std_input, mean_target, std_target)
    out_cond, out_tgt = module((conditioning, target))
    jax.block_until_ready(out_cond)
    jax.block_until_ready(out_tgt)

    # Pure-JAX reference check.
    ref_cond = (conditioning - mean_input[None, :, None, None]) / std_input[None, :, None, None]
    ref_tgt = (target - mean_target[None, :, None, None]) / std_target[None, :, None, None]
    assert jnp.allclose(out_cond, ref_cond, atol=1e-5, rtol=1e-5)
    assert jnp.allclose(out_tgt, ref_tgt, atol=1e-5, rtol=1e-5)

    print("KERNEL_OK")
</pallas_src>

<mosaic_0001>
module attributes {stable_mosaic.version = 11 : i64} {
  func.func @_normalize_kernel(%arg0: i32, %arg1: i32, %arg2: memref<8x256xf32, #tpu.memory_space<vmem>>, %arg3: memref<8x1xf32, #tpu.memory_space<vmem>>, %arg4: memref<8x1xf32, #tpu.memory_space<vmem>>, %arg5: memref<8x256xf32, #tpu.memory_space<vmem>>) attributes {dimension_semantics = [#tpu.dimension_semantics<parallel>, #tpu.dimension_semantics<parallel>], iteration_bounds = array<i64: 1, 1>, scalar_prefetch = 0 : i64, scratch_operands = 0 : i64, tpu.core_type = #tpu.core_type<tc>, window_params = [{transform_indices = @transform_0, window_bounds = array<i64: 8, 256>}, {transform_indices = @transform_1, window_bounds = array<i64: 8, 1>}, {transform_indices = @transform_2, window_bounds = array<i64: 8, 1>}, {transform_indices = @transform_3, window_bounds = array<i64: 8, 256>}]} {
    %c0 = arith.constant 0 : index
    %c0_0 = arith.constant 0 : index
    %0 = vector.load %arg2[%c0, %c0_0] : memref<8x256xf32, #tpu.memory_space<vmem>>, vector<8x256xf32>
    %c0_1 = arith.constant 0 : index
    %c0_2 = arith.constant 0 : index
    %1 = vector.load %arg3[%c0_1, %c0_2] : memref<8x1xf32, #tpu.memory_space<vmem>>, vector<8x1xf32>
    %2 = vector.broadcast %1 : vector<8x1xf32> to vector<8x256xf32>
    %3 = arith.mulf %0, %2 : vector<8x256xf32>
    %c0_3 = arith.constant 0 : index
    %c0_4 = arith.constant 0 : index
    %4 = vector.load %arg4[%c0_3, %c0_4] : memref<8x1xf32, #tpu.memory_space<vmem>>, vector<8x1xf32>
    %5 = vector.broadcast %4 : vector<8x1xf32> to vector<8x256xf32>
    %6 = arith.addf %3, %5 : vector<8x256xf32>
    %c0_5 = arith.constant 0 : index
    %c0_6 = arith.constant 0 : index
    %7 = vector.load %arg5[%c0_5, %c0_6] : memref<8x256xf32, #tpu.memory_space<vmem>>, vector<8x256xf32>
    tpu.vector_store %arg5[%c0_5, %c0_6], %6 {strides = array<i32>} : memref<8x256xf32, #tpu.memory_space<vmem>>, vector<8x256xf32>,
    return
  }
  func.func @transform_0(%arg0: i32, %arg1: i32) -> (i32, i32) {
    %c0_i32 = arith.constant 0 : i32
    return %arg0, %arg1 : i32, i32
  }
  func.func @transform_1(%arg0: i32, %arg1: i32) -> (i32, i32) {
    %c0_i32 = arith.constant 0 : i32
    %c0_i32_0 = arith.constant 0 : i32
    return %arg0, %c0_i32 : i32, i32
  }
  func.func @transform_2(%arg0: i32, %arg1: i32) -> (i32, i32) {
    %c0_i32 = arith.constant 0 : i32
    %c0_i32_0 = arith.constant 0 : i32
    return %arg0, %c0_i32 : i32, i32
  }
  func.func @transform_3(%arg0: i32, %arg1: i32) -> (i32, i32) {
    %c0_i32 = arith.constant 0 : i32
    return %arg0, %arg1 : i32, i32
  }
}

</mosaic_0001>

<llo_original>
// kernel: tpu_custom_call.1
$region0: #{tpu_custom_call.1}
  #allocation0 [shape = 'u32[]', space=smem, size = 0x4, offset = 0x4, fixed_abs, tag = 'smem constant byte address 0x4 - core index']
  #allocation1 [shape = 'u32[144,128]{1,0:T(1,128)}', space=vmem, size = 0x12000, scoped, tag = 'internal scratch']
  %s0 = inlined_call_operand.vmem [shape: f32[8,256], index: 0, kind: input, shape index: {}]
  %s1 = inlined_call_operand.vmem [shape: f32[8,1], index: 1, kind: input, shape index: {}]
  %s2 = inlined_call_operand.vmem [shape: f32[8,1], index: 2, kind: input, shape index: {}]
  %s3 = inlined_call_operand.hbm [shape: f32[8,256], index: 3, kind: output, shape index: {}]
  %s4 = sld [smem:[#allocation0]]
  $region22: #{tpu_custom_call.1} parent=0
    _
  %s6 = ssub.s32 1, %s4
  %s7 = scalar_select 0, %s6, %s4
  $region1: #{tpu_custom_call.1} parent=0
    #allocation2 [shape = 'u8[8192]{0}', space=vmem, size = 0x2000, scoped, tag = 'output window, operand 0, single buffered']
    #allocation3 [shape = 's32[1]{0}', space=sflag, size = 0x4, scoped, tag = 'scoped memory for tpu_custom_call.1']
    %8 = vsyncpa [#allocation3], 0
    // Predicated region
    $region2: #{tpu_custom_call.1} parent=1 // pred_check
      _
    $region3: #{tpu_custom_call.1} parent=1 // pred_check_branch
      %10 = sbr.rel (0) target = $region5
    $region4: #{tpu_custom_call.1} parent=1 // pred_region
      _
    $region5: #{tpu_custom_call.1} parent=1 // pred_fallthru
      _
    // Predicated region
    $region6: #{tpu_custom_call.1} parent=1 // pred_check
      _
    $region7: #{tpu_custom_call.1} parent=1 // pred_check_branch
      %12 = sbr.rel (0) target = $region9
    $region8: #{tpu_custom_call.1} parent=1 // pred_region
      _
    $region9: #{tpu_custom_call.1} parent=1 // pred_fallthru
      _
    // Predicated region
    $region10: #{tpu_custom_call.1} parent=1 // pred_check
      _
    $region11: #{tpu_custom_call.1} parent=1 // pred_check_branch
      %14 = sbr.rel (0) target = $region13
    $region12: #{tpu_custom_call.1} parent=1 // pred_region
      _
    $region13: #{tpu_custom_call.1} parent=1 // pred_fallthru
      _
    %v15 = vld [vmem:[%s0] sm:$0xff]
    %v16 = vld [vmem:[%s0 + $0x8] sm:$0xff]
    %v17 = vld [vmem:[%s1] sm:$0xff]
    %19 = vset.pattern.permute.xlu0 0
    %20 = vperm.xlu0 %19, %v17
    %v21 = vpop.permute.xlu0 %20
    %v23 = vmul.f32 %v15, %v21
    %v24 = vmul.f32 %v16, %v21
    %v25 = vld [vmem:[%s2] sm:$0xff]
    %27 = vset.pattern.permute.xlu0 0
    %28 = vperm.xlu0 %27, %v25
    %v29 = vpop.permute.xlu0 %28
    %v31 = vadd.f32 %v23, %v29
    %v32 = vadd.f32 %v24, %v29
    %33 = vst [vmem:[#allocation2] sm:$0xff] %v31
    %34 = vst [vmem:[#allocation2 + $0x8] sm:$0xff] %v32
    // Predicated region
    $region14: #{tpu_custom_call.1} parent=1 // pred_check
      _
    $region15: #{tpu_custom_call.1} parent=1 // pred_check_branch
      %36 = sbr.rel (0) target = $region17
    $region16: #{tpu_custom_call.1} parent=1 // pred_region
      %s38 = ssub.s32 256, 256
      %39 = vsyncadd [#allocation3], %s38
      %s41 = sshll.u32 [#allocation2], 4
      %s42 = int_to_ptr.vmem [resolvable:$true] %s41
      %44 = dma.vmem_to_hbm [thread:$0]  %s42, 256, %s3, [#allocation3]
    $region17: #{tpu_custom_call.1} parent=1 // pred_fallthru
      _
    // Predicated region
    $region18: #{tpu_custom_call.1} parent=1 // pred_check
      _
    $region19: #{tpu_custom_call.1} parent=1 // pred_check_branch
      %46 = sbr.rel (0) target = $region21
    $region20: #{tpu_custom_call.1} parent=1 // pred_region
      %47 = dma.done [#allocation3], 256
    $region21: #{tpu_custom_call.1} parent=1 // pred_fallthru
      _
    %48 = vsyncpa [#allocation3], 1

</llo_original>
